<compile_context>
chip_gen: v7x
topology: tpu7x:2x2x1
jax: 0.10.0
libtpu: 0.0.40
codegen_flags: <defaults>
</compile_context>

<pallas_src>
import jax
import jax.numpy as jnp
from jax.experimental import pallas as pl
from jax.experimental.pallas import tpu as pltpu

LANE = 128
SUBLANE = 8


def _round_up(n, m):
    return ((n + m - 1) // m) * m


def _pad2(a, shape):
    return jnp.pad(a, [(0, s - d) for d, s in zip(a.shape, shape)])


def mlp_kernel(x_ref, w1_ref, b1_ref, w2_ref, b2_ref, w3_ref, b3_ref,
               y_ref, h2_ref):
    # One TM-row batch tile: 3 bf16 matmuls on the MXU (f32 accumulation),
    # bias add + ReLU in f32 on the VPU.
    x = x_ref[...].astype(jnp.bfloat16)

    h1 = jnp.dot(x, w1_ref[...], preferred_element_type=jnp.float32) + b1_ref[...]
    h1 = jnp.maximum(h1, 0.0)

    h2 = jnp.dot(h1.astype(jnp.bfloat16), w2_ref[...],
                 preferred_element_type=jnp.float32) + b2_ref[...]
    h2 = jnp.maximum(h2, 0.0)

    y = jnp.dot(h2.astype(jnp.bfloat16), w3_ref[...],
                preferred_element_type=jnp.float32) + b3_ref[...]

    h2_ref[...] = h2.astype(h2_ref.dtype)
    y_ref[...] = y.astype(y_ref.dtype)


def pad_params(params):
    """Pad feature dims to multiples of 128 (lane-dense), cast weights to bf16.

    Zero padding is exact: padded activation columns are relu(0 + 0) = 0 and
    only ever multiply zero weight rows downstream.
    """
    w1, b1, w2, b2, w3, b3 = params
    d_in, h1 = w1.shape
    h2 = w2.shape[1]
    d_out = w3.shape[1]
    h1p, h2p, dop = _round_up(h1, LANE), _round_up(h2, LANE), _round_up(d_out, LANE)

    w1p = _pad2(w1, (d_in, h1p)).astype(jnp.bfloat16)
    b1p = _pad2(b1, (1, h1p)).astype(jnp.float32)
    w2p = _pad2(w2, (h1p, h2p)).astype(jnp.bfloat16)
    b2p = _pad2(b2, (1, h2p)).astype(jnp.float32)
    w3p = _pad2(w3, (h2p, dop)).astype(jnp.bfloat16)
    b3p = _pad2(b3, (1, dop)).astype(jnp.float32)
    return (w1p, b1p, w2p, b2p, w3p, b3p)


def mlp_forward(x, padded_params, out_dim, h2_dim, *, tm_max=512):
    """x: (B, C, H, W) or (B, D). Returns (y_pred, h_2) like the torch module."""
    w1, b1, w2, b2, w3, b3 = padded_params
    B = x.shape[0]
    x2d = jnp.reshape(x, (B, -1))            # NCHW row-major flatten == torch .view
    d_in = x2d.shape[1]
    h1p, h2p, dop = w1.shape[1], w2.shape[1], w3.shape[1]

    # Batch tile: largest of up to tm_max rows, multiple of 8 (sublane).
    tm = min(tm_max, _round_up(B, SUBLANE))
    bp = _round_up(B, tm)
    if bp != B:
        x2d = jnp.pad(x2d, ((0, bp - B), (0, 0)))
    grid = (bp // tm,)

    y_p, h2_p = pl.pallas_call(
        mlp_kernel,
        grid=grid,
        in_specs=[
            pl.BlockSpec((tm, d_in), lambda i: (i, 0)),     # x: streamed per tile
            pl.BlockSpec((d_in, h1p), lambda i: (0, 0)),    # weights/biases resident
            pl.BlockSpec((1, h1p), lambda i: (0, 0)),
            pl.BlockSpec((h1p, h2p), lambda i: (0, 0)),
            pl.BlockSpec((1, h2p), lambda i: (0, 0)),
            pl.BlockSpec((h2p, dop), lambda i: (0, 0)),
            pl.BlockSpec((1, dop), lambda i: (0, 0)),
        ],
        out_specs=(
            pl.BlockSpec((tm, dop), lambda i: (i, 0)),      # lane-dense outputs
            pl.BlockSpec((tm, h2p), lambda i: (i, 0)),
        ),
        out_shape=(
            jax.ShapeDtypeStruct((bp, dop), jnp.float32),
            jax.ShapeDtypeStruct((bp, h2p), jnp.float32),
        ),
        compiler_params=pltpu.CompilerParams(
            dimension_semantics=("parallel",),              # megacore on v7x
            vmem_limit_bytes=48 * 1024 * 1024,              # safe within v7x 64 MiB
        ),
    )(x2d, w1, b1, w2, b2, w3, b3)

    # Slice off batch and lane padding (outside the kernel).
    return y_p[:B, :out_dim], h2_p[:B, :h2_dim]


def init_params(key, input_dim, output_dim, hidden_l_dims):
    """Deterministic synthetic parameters (torch-Linear shapes, transposed)."""
    h1, h2 = hidden_l_dims
    ks = jax.random.split(key, 6)

    def lin(kw, kb, din, dout):
        bound = 1.0 / jnp.sqrt(jnp.float32(din))    # torch default init range
        w = jax.random.uniform(kw, (din, dout), jnp.float32, -bound, bound)
        b = jax.random.uniform(kb, (1, dout), jnp.float32, -bound, bound)
        return w, b

    w1, b1 = lin(ks[0], ks[1], input_dim, h1)
    w2, b2 = lin(ks[2], ks[3], h1, h2)
    w3, b3 = lin(ks[4], ks[5], h2, output_dim)
    return (w1, b1, w2, b2, w3, b3)


def ref_forward_bf16(x, params):
    """Pure-JAX reference using the same bf16-operand / f32-accumulate math."""
    w1, b1, w2, b2, w3, b3 = params
    B = x.shape[0]
    x2d = jnp.reshape(x, (B, -1))
    h1 = jnp.maximum(
        jnp.dot(x2d.astype(jnp.bfloat16), w1.astype(jnp.bfloat16),
                preferred_element_type=jnp.float32) + b1, 0.0)
    h2 = jnp.maximum(
        jnp.dot(h1.astype(jnp.bfloat16), w2.astype(jnp.bfloat16),
                preferred_element_type=jnp.float32) + b2, 0.0)
    y = jnp.dot(h2.astype(jnp.bfloat16), w3.astype(jnp.bfloat16),
                preferred_element_type=jnp.float32) + b3
    return y, h2


if __name__ == "__main__":
    key = jax.random.PRNGKey(0)
    k_x, k_p = jax.random.split(key)

    # Small shapes: batch=2, "image" input (2, 4, 4, 4) -> input_dim = 64
    B, C, H, W = 2, 4, 4, 4
    input_dim = C * H * W          # 64
    hidden_l_dims = [32, 32]
    output_dim = 16

    x = jax.random.normal(k_x, (B, C, H, W), jnp.float32)
    params = init_params(k_p, input_dim, output_dim, hidden_l_dims)
    padded = pad_params(params)    # one-time: pad to 128 lanes, weights -> bf16

    y_pred, h_2 = mlp_forward(x, padded, output_dim, hidden_l_dims[1])
    jax.block_until_ready((y_pred, h_2))

    # Correctness check vs pure-JAX reference with matching precision.
    y_ref, h2_ref = ref_forward_bf16(x, params)
    assert y_pred.shape == (B, output_dim) and h_2.shape == (B, hidden_l_dims[1])
    assert jnp.allclose(y_pred, y_ref, atol=1e-3, rtol=1e-3), "y_pred mismatch"
    assert jnp.allclose(h_2, h2_ref, atol=1e-3, rtol=1e-3), "h_2 mismatch"

    print("KERNEL_OK")
</pallas_src>

<mosaic_0001>
module attributes {stable_mosaic.version = 11 : i64} {
  func.func @mlp_kernel(%arg0: i32, %arg1: memref<8x64xf32, #tpu.memory_space<vmem>>, %arg2: memref<64x128xbf16, #tpu.memory_space<vmem>>, %arg3: memref<1x128xf32, #tpu.memory_space<vmem>>, %arg4: memref<128x128xbf16, #tpu.memory_space<vmem>>, %arg5: memref<1x128xf32, #tpu.memory_space<vmem>>, %arg6: memref<128x128xbf16, #tpu.memory_space<vmem>>, %arg7: memref<1x128xf32, #tpu.memory_space<vmem>>, %arg8: memref<8x128xf32, #tpu.memory_space<vmem>>, %arg9: memref<8x128xf32, #tpu.memory_space<vmem>>) attributes {dimension_semantics = [#tpu.dimension_semantics<parallel>], iteration_bounds = array<i64: 1>, scalar_prefetch = 0 : i64, scratch_operands = 0 : i64, tpu.core_type = #tpu.core_type<tc>, window_params = [{transform_indices = @transform_0, window_bounds = array<i64: 8, 64>}, {pipeline_mode = #tpu.pipeline_mode<synchronous>, transform_indices = @transform_1, window_bounds = array<i64: 64, 128>}, {pipeline_mode = #tpu.pipeline_mode<synchronous>, transform_indices = @transform_2, window_bounds = array<i64: 1, 128>}, {pipeline_mode = #tpu.pipeline_mode<synchronous>, transform_indices = @transform_3, window_bounds = array<i64: 128, 128>}, {pipeline_mode = #tpu.pipeline_mode<synchronous>, transform_indices = @transform_4, window_bounds = array<i64: 1, 128>}, {pipeline_mode = #tpu.pipeline_mode<synchronous>, transform_indices = @transform_5, window_bounds = array<i64: 128, 128>}, {pipeline_mode = #tpu.pipeline_mode<synchronous>, transform_indices = @transform_6, window_bounds = array<i64: 1, 128>}, {transform_indices = @transform_7, window_bounds = array<i64: 8, 128>}, {transform_indices = @transform_8, window_bounds = array<i64: 8, 128>}]} {
    %c0 = arith.constant 0 : index
    %c0_0 = arith.constant 0 : index
    %0 = vector.load %arg1[%c0, %c0_0] : memref<8x64xf32, #tpu.memory_space<vmem>>, vector<8x64xf32>
    %1 = arith.truncf %0 : vector<8x64xf32> to vector<8x64xbf16>
    %c0_1 = arith.constant 0 : index
    %c0_2 = arith.constant 0 : index
    %2 = vector.load %arg2[%c0_1, %c0_2] : memref<64x128xbf16, #tpu.memory_space<vmem>>, vector<64x128xbf16>
    %cst = arith.constant dense<0.000000e+00> : vector<8x128xf32>
    %3 = tpu.matmul %1, %2, %cst {dimension_numbers = #tpu.dot_dimension_numbers<[1], [0], [0], [1], [0, 0, 1, 1], [], []>} : vector<8x64xbf16>, vector<64x128xbf16>, vector<8x128xf32> -> vector<8x128xf32>
    %c0_3 = arith.constant 0 : index
    %c0_4 = arith.constant 0 : index
    %4 = vector.load %arg3[%c0_3, %c0_4] : memref<1x128xf32, #tpu.memory_space<vmem>>, vector<1x128xf32>
    %5 = vector.broadcast %4 : vector<1x128xf32> to vector<8x128xf32>
    %6 = arith.addf %3, %5 : vector<8x128xf32>
    %cst_5 = arith.constant 0.000000e+00 : f32
    %7 = vector.broadcast %cst_5 : f32 to vector<8x128xf32>
    %8 = arith.maximumf %6, %7 : vector<8x128xf32>
    %9 = arith.truncf %8 : vector<8x128xf32> to vector<8x128xbf16>
    %c0_6 = arith.constant 0 : index
    %c0_7 = arith.constant 0 : index
    %10 = vector.load %arg4[%c0_6, %c0_7] : memref<128x128xbf16, #tpu.memory_space<vmem>>, vector<128x128xbf16>
    %cst_8 = arith.constant dense<0.000000e+00> : vector<8x128xf32>
    %11 = tpu.matmul %9, %10, %cst_8 {dimension_numbers = #tpu.dot_dimension_numbers<[1], [0], [0], [1], [0, 0, 1, 1], [], []>} : vector<8x128xbf16>, vector<128x128xbf16>, vector<8x128xf32> -> vector<8x128xf32>
    %c0_9 = arith.constant 0 : index
    %c0_10 = arith.constant 0 : index
    %12 = vector.load %arg5[%c0_9, %c0_10] : memref<1x128xf32, #tpu.memory_space<vmem>>, vector<1x128xf32>
    %13 = vector.broadcast %12 : vector<1x128xf32> to vector<8x128xf32>
    %14 = arith.addf %11, %13 : vector<8x128xf32>
    %cst_11 = arith.constant 0.000000e+00 : f32
    %15 = vector.broadcast %cst_11 : f32 to vector<8x128xf32>
    %16 = arith.maximumf %14, %15 : vector<8x128xf32>
    %17 = arith.truncf %16 : vector<8x128xf32> to vector<8x128xbf16>
    %c0_12 = arith.constant 0 : index
    %c0_13 = arith.constant 0 : index
    %18 = vector.load %arg6[%c0_12, %c0_13] : memref<128x128xbf16, #tpu.memory_space<vmem>>, vector<128x128xbf16>
    %cst_14 = arith.constant dense<0.000000e+00> : vector<8x128xf32>
    %19 = tpu.matmul %17, %18, %cst_14 {dimension_numbers = #tpu.dot_dimension_numbers<[1], [0], [0], [1], [0, 0, 1, 1], [], []>} : vector<8x128xbf16>, vector<128x128xbf16>, vector<8x128xf32> -> vector<8x128xf32>
    %c0_15 = arith.constant 0 : index
    %c0_16 = arith.constant 0 : index
    %20 = vector.load %arg7[%c0_15, %c0_16] : memref<1x128xf32, #tpu.memory_space<vmem>>, vector<1x128xf32>
    %21 = vector.broadcast %20 : vector<1x128xf32> to vector<8x128xf32>
    %22 = arith.addf %19, %21 : vector<8x128xf32>
    %c0_17 = arith.constant 0 : index
    %c0_18 = arith.constant 0 : index
    %23 = vector.load %arg9[%c0_17, %c0_18] : memref<8x128xf32, #tpu.memory_space<vmem>>, vector<8x128xf32>
    tpu.vector_store %arg9[%c0_17, %c0_18], %16 {strides = array<i32>} : memref<8x128xf32, #tpu.memory_space<vmem>>, vector<8x128xf32>,
    %c0_19 = arith.constant 0 : index
    %c0_20 = arith.constant 0 : index
    %24 = vector.load %arg8[%c0_19, %c0_20] : memref<8x128xf32, #tpu.memory_space<vmem>>, vector<8x128xf32>
    tpu.vector_store %arg8[%c0_19, %c0_20], %22 {strides = array<i32>} : memref<8x128xf32, #tpu.memory_space<vmem>>, vector<8x128xf32>,
    return
  }
  func.func @transform_0(%arg0: i32) -> (i32, i32) {
    %c0_i32 = arith.constant 0 : i32
    %c0_i32_0 = arith.constant 0 : i32
    return %arg0, %c0_i32 : i32, i32
  }
  func.func @transform_1(%arg0: i32) -> (i32, i32) {
    %c0_i32 = arith.constant 0 : i32
    %c0_i32_0 = arith.constant 0 : i32
    %c0_i32_1 = arith.constant 0 : i32
    return %c0_i32, %c0_i32_0 : i32, i32
  }
  func.func @transform_2(%arg0: i32) -> (i32, i32) {
    %c0_i32 = arith.constant 0 : i32
    %c0_i32_0 = arith.constant 0 : i32
    %c0_i32_1 = arith.constant 0 : i32
    return %c0_i32, %c0_i32_0 : i32, i32
  }
  func.func @transform_3(%arg0: i32) -> (i32, i32) {
    %c0_i32 = arith.constant 0 : i32
    %c0_i32_0 = arith.constant 0 : i32
    %c0_i32_1 = arith.constant 0 : i32
    return %c0_i32, %c0_i32_0 : i32, i32
  }
  func.func @transform_4(%arg0: i32) -> (i32, i32) {
    %c0_i32 = arith.constant 0 : i32
    %c0_i32_0 = arith.constant 0 : i32
    %c0_i32_1 = arith.constant 0 : i32
    return %c0_i32, %c0_i32_0 : i32, i32
  }
  func.func @transform_5(%arg0: i32) -> (i32, i32) {
    %c0_i32 = arith.constant 0 : i32
    %c0_i32_0 = arith.constant 0 : i32
    %c0_i32_1 = arith.constant 0 : i32
    return %c0_i32, %c0_i32_0 : i32, i32
  }
  func.func @transform_6(%arg0: i32) -> (i32, i32) {
    %c0_i32 = arith.constant 0 : i32
    %c0_i32_0 = arith.constant 0 : i32
    %c0_i32_1 = arith.constant 0 : i32
    return %c0_i32, %c0_i32_0 : i32, i32
  }
  func.func @transform_7(%arg0: i32) -> (i32, i32) {
    %c0_i32 = arith.constant 0 : i32
    %c0_i32_0 = arith.constant 0 : i32
    return %arg0, %c0_i32 : i32, i32
  }
  func.func @transform_8(%arg0: i32) -> (i32, i32) {
    %c0_i32 = arith.constant 0 : i32
    %c0_i32_0 = arith.constant 0 : i32
    return %arg0, %c0_i32 : i32, i32
  }
}

</mosaic_0001>

<llo_original>
// kernel: tpu_custom_call.1
$region0: #{tpu_custom_call.1}
  #allocation0 [shape = 'u32[]', space=smem, size = 0x4, offset = 0x4, fixed_abs, tag = 'smem constant byte address 0x4 - core index']
  #allocation1 [shape = 'u32[144,128]{1,0:T(1,128)}', space=vmem, size = 0x12000, scoped, tag = 'internal scratch']
  %s0 = inlined_call_operand.hbm [shape: f32[8,64], index: 0, kind: input, shape index: {}]
  %s1 = inlined_call_operand.hbm [shape: bf16[64,128], index: 1, kind: input, shape index: {}]
  %s2 = inlined_call_operand.vmem [shape: f32[1,128], index: 2, kind: input, shape index: {}]
  %s3 = inlined_call_operand.hbm [shape: bf16[128,128], index: 3, kind: input, shape index: {}]
  %s4 = inlined_call_operand.vmem [shape: f32[1,128], index: 4, kind: input, shape index: {}]
  %s5 = inlined_call_operand.hbm [shape: bf16[128,128], index: 5, kind: input, shape index: {}]
  %s6 = inlined_call_operand.vmem [shape: f32[1,128], index: 6, kind: input, shape index: {}]
  %s7 = inlined_call_operand.hbm [shape: f32[8,128], index: 7, kind: output, shape index: {0}]
  %s8 = inlined_call_operand.hbm [shape: f32[8,128], index: 8, kind: output, shape index: {1}]
  %9 = xla_tuple %s7, %s8
  %s10 = sld [smem:[#allocation0]]
  $region62: #{tpu_custom_call.1} parent=0
    _
  %s12 = ssub.s32 1, %s10
  %s13 = scalar_select 0, %s12, %s10
  $region1: #{tpu_custom_call.1} parent=0
    #allocation2 [shape = 'u8[4096]{0}', space=vmem, size = 0x1000, scoped, tag = 'input window, operand 0, single buffered']
    #allocation3 [shape = 's32[1]{0}', space=sflag, size = 0x4, scoped, tag = 'scoped memory for tpu_custom_call.1']
    #allocation4 [shape = 's32[1]{0}', space=sflag, size = 0x4, scoped, tag = 'scoped memory for tpu_custom_call.1']
    #allocation5 [shape = 'u8[16384]{0}', space=vmem, size = 0x4000, scoped, tag = 'input window, operand 1, single buffered']
    #allocation6 [shape = 's32[1]{0}', space=sflag, size = 0x4, scoped, tag = 'scoped memory for tpu_custom_call.1']
    #allocation7 [shape = 'u8[32768]{0}', space=vmem, size = 0x8000, scoped, tag = 'input window, operand 3, single buffered']
    #allocation8 [shape = 'u8[32768]{0}', space=vmem, size = 0x8000, scoped, tag = 'input window, operand 5, single buffered']
    #allocation9 [shape = 's32[1]{0}', space=sflag, size = 0x4, scoped, tag = 'scoped memory for tpu_custom_call.1']
    #allocation10 [shape = 'u8[4096]{0}', space=vmem, size = 0x1000, scoped, tag = 'output window, operand 0, single buffered']
    #allocation11 [shape = 'u8[4096]{0}', space=vmem, size = 0x1000, scoped, tag = 'output window, operand 1, single buffered']
    #allocation12 [shape = 's32[1]{0}', space=sflag, size = 0x4, scoped, tag = 'scoped memory for tpu_custom_call.1']
    %14 = vsyncpa [#allocation3], 0
    %15 = vsyncpa [#allocation6], 0
    %16 = vsyncpa [#allocation9], 0
    %17 = vsyncpa [#allocation4], 0
    %18 = vsyncpa [#allocation12], 0
    // Predicated region
    $region2: #{tpu_custom_call.1} parent=1 // pred_check
      _
    $region3: #{tpu_custom_call.1} parent=1 // pred_check_branch
      %20 = sbr.rel (0) target = $region5
    $region4: #{tpu_custom_call.1} parent=1 // pred_region
      %s22 = ssub.s32 128, 128
      %23 = vsyncadd [#allocation3], %s22
      %s25 = sshll.u32 [#allocation2], 4
      %s26 = int_to_ptr.vmem [resolvable:$true] %s25
      %28 = dma.hbm_to_vmem [thread:$0]  %s0, 128, %s26, [#allocation3]
    $region5: #{tpu_custom_call.1} parent=1 // pred_fallthru
      _
    // Predicated region
    $region6: #{tpu_custom_call.1} parent=1 // pred_check
      _
    $region7: #{tpu_custom_call.1} parent=1 // pred_check_branch
      %30 = sbr.rel (0) target = $region9
    $region8: #{tpu_custom_call.1} parent=1 // pred_region
      %s32 = ssub.s32 512, 512
      %33 = vsyncadd [#allocation6], %s32
      %s34 = sshll.u32 [#allocation5], 4
      %s35 = int_to_ptr.vmem [resolvable:$true] %s34
      %40 = dma.hbm_to_vmem [thread:$0]  %s1, 512, %s35, [#allocation6], 64, 64, 4
    $region9: #{tpu_custom_call.1} parent=1 // pred_fallthru
      _
    // Predicated region
    $region10: #{tpu_custom_call.1} parent=1 // pred_check
      _
    $region11: #{tpu_custom_call.1} parent=1 // pred_check_branch
      %42 = sbr.rel (0) target = $region13
    $region12: #{tpu_custom_call.1} parent=1 // pred_region
      _
    $region13: #{tpu_custom_call.1} parent=1 // pred_fallthru
      _
    // Predicated region
    $region14: #{tpu_custom_call.1} parent=1 // pred_check
      _
    $region15: #{tpu_custom_call.1} parent=1 // pred_check_branch
      %44 = sbr.rel (0) target = $region17
    $region16: #{tpu_custom_call.1} parent=1 // pred_region
      %s46 = ssub.s32 1024, 1024
      %47 = vsyncadd [#allocation6], %s46
      %s48 = sshll.u32 [#allocation7], 4
      %s49 = int_to_ptr.vmem [resolvable:$true] %s48
      %54 = dma.hbm_to_vmem [thread:$0]  %s3, 1024, %s49, [#allocation6], 64, 64, 4
    $region17: #{tpu_custom_call.1} parent=1 // pred_fallthru
      _
    // Predicated region
    $region18: #{tpu_custom_call.1} parent=1 // pred_check
      _
    $region19: #{tpu_custom_call.1} parent=1 // pred_check_branch
      %56 = sbr.rel (0) target = $region21
    $region20: #{tpu_custom_call.1} parent=1 // pred_region
      _
    $region21: #{tpu_custom_call.1} parent=1 // pred_fallthru
      _
    // Predicated region
    $region22: #{tpu_custom_call.1} parent=1 // pred_check
      _
    $region23: #{tpu_custom_call.1} parent=1 // pred_check_branch
      %58 = sbr.rel (0) target = $region25
    $region24: #{tpu_custom_call.1} parent=1 // pred_region
      %s60 = ssub.s32 1024, 1024
      %61 = vsyncadd [#allocation9], %s60
      %s62 = sshll.u32 [#allocation8], 4
      %s63 = int_to_ptr.vmem [resolvable:$true] %s62
      %68 = dma.hbm_to_vmem [thread:$0]  %s5, 1024, %s63, [#allocation9], 64, 64, 4
    $region25: #{tpu_custom_call.1} parent=1 // pred_fallthru
      _
    // Predicated region
    $region26: #{tpu_custom_call.1} parent=1 // pred_check
      _
    $region27: #{tpu_custom_call.1} parent=1 // pred_check_branch
      %70 = sbr.rel (0) target = $region29
    $region28: #{tpu_custom_call.1} parent=1 // pred_region
      _
    $region29: #{tpu_custom_call.1} parent=1 // pred_fallthru
      _
    // Predicated region
    $region30: #{tpu_custom_call.1} parent=1 // pred_check
      _
    $region31: #{tpu_custom_call.1} parent=1 // pred_check_branch
      %72 = sbr.rel (0) target = $region33
    $region32: #{tpu_custom_call.1} parent=1 // pred_region
      %73 = dma.done [#allocation3], 128
    $region33: #{tpu_custom_call.1} parent=1 // pred_fallthru
      _
    // Predicated region
    $region34: #{tpu_custom_call.1} parent=1 // pred_check
      _
    $region35: #{tpu_custom_call.1} parent=1 // pred_check_branch
      %75 = sbr.rel (0) target = $region37
    $region36: #{tpu_custom_call.1} parent=1 // pred_region
      %76 = dma.done [#allocation6], 512
    $region37: #{tpu_custom_call.1} parent=1 // pred_fallthru
      _
    // Predicated region
    $region38: #{tpu_custom_call.1} parent=1 // pred_check
      _
    $region39: #{tpu_custom_call.1} parent=1 // pred_check_branch
      %78 = sbr.rel (0) target = $region41
    $region40: #{tpu_custom_call.1} parent=1 // pred_region
      %79 = dma.done [#allocation6], 1024
    $region41: #{tpu_custom_call.1} parent=1 // pred_fallthru
      _
    // Predicated region
    $region42: #{tpu_custom_call.1} parent=1 // pred_check
      _
    $region43: #{tpu_custom_call.1} parent=1 // pred_check_branch
      %81 = sbr.rel (0) target = $region45
    $region44: #{tpu_custom_call.1} parent=1 // pred_region
      %82 = dma.done [#allocation9], 1024
    $region45: #{tpu_custom_call.1} parent=1 // pred_fallthru
      _
    %v84 = vld [vmem:[#allocation2] sm:$0xff]
    %v85 = vpack.c.bf16 %v84, %v84
    %v86 = vld [vmem:[#allocation5] sm:$0xf]
    %v87 = vld [vmem:[#allocation5 + $0x4] sm:$0xf]
    %v88 = vld [vmem:[#allocation5 + $0x8] sm:$0xf]
    %v89 = vld [vmem:[#allocation5 + $0xc] sm:$0xf]
    %v90 = vld [vmem:[#allocation5 + $0x10] sm:$0xf]
    %v91 = vld [vmem:[#allocation5 + $0x14] sm:$0xf]
    %v92 = vld [vmem:[#allocation5 + $0x18] sm:$0xf]
    %v93 = vld [vmem:[#allocation5 + $0x1c] sm:$0xf]
    %v94 = vld [vmem:[%s2] sm:$0x1]
    %v96 = vlaneseq
    %v97 = vshrl.u32 %v96, 7
    %v98 = vsub.s32 0, %v97
    %v99 = vrot.slane %v94, %v98
    %v109 = vunpack.c.l.b16 %v86
    %v110 = vunpack.c.l.b16 %v87
    %v111 = vunpack.c.l.b16 %v88
    %v112 = vunpack.c.l.b16 %v89
    %v113 = vunpack.c.l.b16 %v90
    %v114 = vunpack.c.l.b16 %v91
    %v115 = vunpack.c.l.b16 %v92
    %v116 = vunpack.c.l.b16 %v93
    %v117 = vpack.c.b16 %v110, %v109
    %v118 = vpack.c.b16 %v112, %v111
    %v119 = vpack.c.b16 %v114, %v113
    %v120 = vpack.c.b16 %v116, %v115
    %vm125 = vcmask 523264
    %v127 = vsel %vm125, %v85, 0
    %129 = vmatprep.subr.bf16.mxu0 0
    %130 = vmatpush1.bf16.msra.mxu0 %v117
    %131 = vmatprep.subr.bf16.mxu0 0
    %132 = vmatpush1.bf16.msra.mxu0 %v118
    %133 = vmatprep.subr.bf16.mxu0 0
    %134 = vmatpush1.bf16.msra.mxu0 %v119
    %135 = vmatprep.subr.bf16.mxu0 0
    %136 = vmatpush1.bf16.msra.mxu0 %v120
    %137 = vmatprep.subr.bf16.mxu0 0
    %138 = vmatpush1.bf16.msra.mxu0 0
    %139 = vmatprep.subr.bf16.mxu0 0
    %140 = vmatpush1.bf16.msra.mxu0 0
    %141 = vmatprep.subr.bf16.mxu0 0
    %142 = vmatpush1.bf16.msra.mxu0 0
    %143 = vmatprep.subr.bf16.mxu0 0
    %144 = vmatpush1.bf16.msra.mxu0 0
    %145 = vmatprep.subr.bf16.mxu0 0
    %146 = vmatpush1.bf16.msra.mxu0 0
    %147 = vmatprep.subr.bf16.mxu0 0
    %148 = vmatpush1.bf16.msra.mxu0 0
    %149 = vmatprep.subr.bf16.mxu0 0
    %150 = vmatpush1.bf16.msra.mxu0 0
    %151 = vmatprep.subr.bf16.mxu0 0
    %152 = vmatpush1.bf16.msra.mxu0 0
    %153 = vmatprep.subr.bf16.mxu0 0
    %154 = vmatpush1.bf16.msra.mxu0 0
    %155 = vmatprep.subr.bf16.mxu0 0
    %156 = vmatpush1.bf16.msra.mxu0 0
    %157 = vmatprep.subr.bf16.mxu0 0
    %158 = vmatpush1.bf16.msra.mxu0 0
    %159 = vmatprep.subr.bf16.mxu0 0
    %160 = vmatpush1.bf16.msra.mxu0 0
    %161 = vmatprep.mubr.bf16.mxu0 0
    %162 = vmatmul.mubr.bf16.gmra.mrb[0].mxu0 %v127
    %v163 = vpop.f32.mrb[0].mxu0
    %v164 = vadd.f32 %v99, %v163
    %v165 = vpop.f32.mrb[0].mxu0
    %v166 = vpop.f32.mrb[0].mxu0
    %v167 = vpop.f32.mrb[0].mxu0
    %168 = vdwg.mxu0
    %v169 = vmax.f32 %v164, 0.0
    %v170 = vpack.c.bf16 %v169, %v169
    %v171 = vld [vmem:[#allocation7] sm:$0xf]
    %v172 = vld [vmem:[#allocation7 + $0x4] sm:$0xf]
    %v173 = vld [vmem:[#allocation7 + $0x8] sm:$0xf]
    %v174 = vld [vmem:[#allocation7 + $0xc] sm:$0xf]
    %v175 = vld [vmem:[#allocation7 + $0x10] sm:$0xf]
    %v176 = vld [vmem:[#allocation7 + $0x14] sm:$0xf]
    %v177 = vld [vmem:[#allocation7 + $0x18] sm:$0xf]
    %v178 = vld [vmem:[#allocation7 + $0x1c] sm:$0xf]
    %v179 = vld [vmem:[#allocation7 + $0x20] sm:$0xf]
    %v180 = vld [vmem:[#allocation7 + $0x24] sm:$0xf]
    %v181 = vld [vmem:[#allocation7 + $0x28] sm:$0xf]
    %v182 = vld [vmem:[#allocation7 + $0x2c] sm:$0xf]
    %v183 = vld [vmem:[#allocation7 + $0x30] sm:$0xf]
    %v184 = vld [vmem:[#allocation7 + $0x34] sm:$0xf]
    %v185 = vld [vmem:[#allocation7 + $0x38] sm:$0xf]
    %v186 = vld [vmem:[#allocation7 + $0x3c] sm:$0xf]
    %v187 = vld [vmem:[%s4] sm:$0x1]
    %v189 = vlaneseq
    %v190 = vshrl.u32 %v189, 7
    %v191 = vsub.s32 0, %v190
    %v192 = vrot.slane %v187, %v191
    %v210 = vunpack.c.l.b16 %v171
    %v211 = vunpack.c.l.b16 %v172
    %v212 = vunpack.c.l.b16 %v173
    %v213 = vunpack.c.l.b16 %v174
    %v214 = vunpack.c.l.b16 %v175
    %v215 = vunpack.c.l.b16 %v176
    %v216 = vunpack.c.l.b16 %v177
    %v217 = vunpack.c.l.b16 %v178
    %v218 = vunpack.c.l.b16 %v179
    %v219 = vunpack.c.l.b16 %v180
    %v220 = vunpack.c.l.b16 %v181
    %v221 = vunpack.c.l.b16 %v182
    %v222 = vunpack.c.l.b16 %v183
    %v223 = vunpack.c.l.b16 %v184
    %v224 = vunpack.c.l.b16 %v185
    %v225 = vunpack.c.l.b16 %v186
    %v226 = vpack.c.b16 %v211, %v210
    %v227 = vpack.c.b16 %v213, %v212
    %v228 = vpack.c.b16 %v215, %v214
    %v229 = vpack.c.b16 %v217, %v216
    %v230 = vpack.c.b16 %v219, %v218
    %v231 = vpack.c.b16 %v221, %v220
    %v232 = vpack.c.b16 %v223, %v222
    %v233 = vpack.c.b16 %v225, %v224
    %242 = vmatprep.subr.bf16.mxu0 0
    %243 = vmatpush1.bf16.msra.mxu0 %v226
    %244 = vmatprep.subr.bf16.mxu0 0
    %245 = vmatpush1.bf16.msra.mxu0 %v227
    %246 = vmatprep.subr.bf16.mxu0 0
    %247 = vmatpush1.bf16.msra.mxu0 %v228
    %248 = vmatprep.subr.bf16.mxu0 0
    %249 = vmatpush1.bf16.msra.mxu0 %v229
    %250 = vmatprep.subr.bf16.mxu0 0
    %251 = vmatpush1.bf16.msra.mxu0 %v230
    %252 = vmatprep.subr.bf16.mxu0 0
    %253 = vmatpush1.bf16.msra.mxu0 %v231
    %254 = vmatprep.subr.bf16.mxu0 0
    %255 = vmatpush1.bf16.msra.mxu0 %v232
    %256 = vmatprep.subr.bf16.mxu0 0
    %257 = vmatpush1.bf16.msra.mxu0 %v233
    %258 = vmatprep.subr.bf16.mxu0 0
    %259 = vmatpush1.bf16.msra.mxu0 0
    %260 = vmatprep.subr.bf16.mxu0 0
    %261 = vmatpush1.bf16.msra.mxu0 0
    %262 = vmatprep.subr.bf16.mxu0 0
    %263 = vmatpush1.bf16.msra.mxu0 0
    %264 = vmatprep.subr.bf16.mxu0 0
    %265 = vmatpush1.bf16.msra.mxu0 0
    %266 = vmatprep.subr.bf16.mxu0 0
    %267 = vmatpush1.bf16.msra.mxu0 0
    %268 = vmatprep.subr.bf16.mxu0 0
    %269 = vmatpush1.bf16.msra.mxu0 0
    %270 = vmatprep.subr.bf16.mxu0 0
    %271 = vmatpush1.bf16.msra.mxu0 0
    %272 = vmatprep.subr.bf16.mxu0 0
    %273 = vmatpush1.bf16.msra.mxu0 0
    %274 = vmatprep.mubr.bf16.mxu0 0
    %275 = vmatmul.mubr.bf16.gmra.mrb[0].mxu0 %v170
    %v276 = vpop.f32.mrb[0].mxu0
    %v277 = vadd.f32 %v192, %v276
    %v278 = vpop.f32.mrb[0].mxu0
    %v279 = vpop.f32.mrb[0].mxu0
    %v280 = vpop.f32.mrb[0].mxu0
    %281 = vdwg.mxu0
    %v282 = vmax.f32 %v277, 0.0
    %v283 = vpack.c.bf16 %v282, %v282
    %v284 = vld [vmem:[#allocation8] sm:$0xf]
    %v285 = vld [vmem:[#allocation8 + $0x4] sm:$0xf]
    %v286 = vld [vmem:[#allocation8 + $0x8] sm:$0xf]
    %v287 = vld [vmem:[#allocation8 + $0xc] sm:$0xf]
    %v288 = vld [vmem:[#allocation8 + $0x10] sm:$0xf]
    %v289 = vld [vmem:[#allocation8 + $0x14] sm:$0xf]
    %v290 = vld [vmem:[#allocation8 + $0x18] sm:$0xf]
    %v291 = vld [vmem:[#allocation8 + $0x1c] sm:$0xf]
    %v292 = vld [vmem:[#allocation8 + $0x20] sm:$0xf]
    %v293 = vld [vmem:[#allocation8 + $0x24] sm:$0xf]
    %v294 = vld [vmem:[#allocation8 + $0x28] sm:$0xf]
    %v295 = vld [vmem:[#allocation8 + $0x2c] sm:$0xf]
    %v296 = vld [vmem:[#allocation8 + $0x30] sm:$0xf]
    %v297 = vld [vmem:[#allocation8 + $0x34] sm:$0xf]
    %v298 = vld [vmem:[#allocation8 + $0x38] sm:$0xf]
    %v299 = vld [vmem:[#allocation8 + $0x3c] sm:$0xf]
    %v300 = vld [vmem:[%s6] sm:$0x1]
    %v302 = vlaneseq
    %v303 = vshrl.u32 %v302, 7
    %v304 = vsub.s32 0, %v303
    %v305 = vrot.slane %v300, %v304
    %v323 = vunpack.c.l.b16 %v284
    %v324 = vunpack.c.l.b16 %v285
    %v325 = vunpack.c.l.b16 %v286
    %v326 = vunpack.c.l.b16 %v287
    %v327 = vunpack.c.l.b16 %v288
    %v328 = vunpack.c.l.b16 %v289
    %v329 = vunpack.c.l.b16 %v290
    %v330 = vunpack.c.l.b16 %v291
    %v331 = vunpack.c.l.b16 %v292
    %v332 = vunpack.c.l.b16 %v293
    %v333 = vunpack.c.l.b16 %v294
    %v334 = vunpack.c.l.b16 %v295
    %v335 = vunpack.c.l.b16 %v296
    %v336 = vunpack.c.l.b16 %v297
    %v337 = vunpack.c.l.b16 %v298
    %v338 = vunpack.c.l.b16 %v299
    %v339 = vpack.c.b16 %v324, %v323
    %v340 = vpack.c.b16 %v326, %v325
    %v341 = vpack.c.b16 %v328, %v327
    %v342 = vpack.c.b16 %v330, %v329
    %v343 = vpack.c.b16 %v332, %v331
    %v344 = vpack.c.b16 %v334, %v333
    %v345 = vpack.c.b16 %v336, %v335
    %v346 = vpack.c.b16 %v338, %v337
    %355 = vmatprep.subr.bf16.mxu0 0
    %356 = vmatpush1.bf16.msra.mxu0 %v339
    %357 = vmatprep.subr.bf16.mxu0 0
    %358 = vmatpush1.bf16.msra.mxu0 %v340
    %359 = vmatprep.subr.bf16.mxu0 0
    %360 = vmatpush1.bf16.msra.mxu0 %v341
    %361 = vmatprep.subr.bf16.mxu0 0
    %362 = vmatpush1.bf16.msra.mxu0 %v342
    %363 = vmatprep.subr.bf16.mxu0 0
    %364 = vmatpush1.bf16.msra.mxu0 %v343
    %365 = vmatprep.subr.bf16.mxu0 0
    %366 = vmatpush1.bf16.msra.mxu0 %v344
    %367 = vmatprep.subr.bf16.mxu0 0
    %368 = vmatpush1.bf16.msra.mxu0 %v345
    %369 = vmatprep.subr.bf16.mxu0 0
    %370 = vmatpush1.bf16.msra.mxu0 %v346
    %371 = vmatprep.subr.bf16.mxu0 0
    %372 = vmatpush1.bf16.msra.mxu0 0
    %373 = vmatprep.subr.bf16.mxu0 0
    %374 = vmatpush1.bf16.msra.mxu0 0
    %375 = vmatprep.subr.bf16.mxu0 0
    %376 = vmatpush1.bf16.msra.mxu0 0
    %377 = vmatprep.subr.bf16.mxu0 0
    %378 = vmatpush1.bf16.msra.mxu0 0
    %379 = vmatprep.subr.bf16.mxu0 0
    %380 = vmatpush1.bf16.msra.mxu0 0
    %381 = vmatprep.subr.bf16.mxu0 0
    %382 = vmatpush1.bf16.msra.mxu0 0
    %383 = vmatprep.subr.bf16.mxu0 0
    %384 = vmatpush1.bf16.msra.mxu0 0
    %385 = vmatprep.subr.bf16.mxu0 0
    %386 = vmatpush1.bf16.msra.mxu0 0
    %387 = vmatprep.mubr.bf16.mxu0 0
    %388 = vmatmul.mubr.bf16.gmra.mrb[0].mxu0 %v283
    %v389 = vpop.f32.mrb[0].mxu0
    %v390 = vadd.f32 %v305, %v389
    %v391 = vpop.f32.mrb[0].mxu0
    %v392 = vpop.f32.mrb[0].mxu0
    %v393 = vpop.f32.mrb[0].mxu0
    %394 = vdwg.mxu0
    %395 = vst [vmem:[#allocation11] sm:$0xff] %v282
    %396 = vst [vmem:[#allocation10] sm:$0xff] %v390
    // Predicated region
    $region46: #{tpu_custom_call.1} parent=1 // pred_check
      _
    $region47: #{tpu_custom_call.1} parent=1 // pred_check_branch
      %398 = sbr.rel (0) target = $region49
    $region48: #{tpu_custom_call.1} parent=1 // pred_region
      %s400 = ssub.s32 128, 128
      %401 = vsyncadd [#allocation4], %s400
      %s403 = sshll.u32 [#allocation10], 4
      %s404 = int_to_ptr.vmem [resolvable:$true] %s403
      %406 = dma.vmem_to_hbm [thread:$0]  %s404, 128, %s7, [#allocation4]
    $region49: #{tpu_custom_call.1} parent=1 // pred_fallthru
      _
    // Predicated region
    $region50: #{tpu_custom_call.1} parent=1 // pred_check
      _
    $region51: #{tpu_custom_call.1} parent=1 // pred_check_branch
      %408 = sbr.rel (0) target = $region53
    $region52: #{tpu_custom_call.1} parent=1 // pred_region
      %s410 = ssub.s32 128, 128
      %411 = vsyncadd [#allocation12], %s410
      %s413 = sshll.u32 [#allocation11], 4
      %s414 = int_to_ptr.vmem [resolvable:$true] %s413
      %416 = dma.vmem_to_hbm [thread:$0]  %s414, 128, %s8, [#allocation12]
    $region53: #{tpu_custom_call.1} parent=1 // pred_fallthru
      _
    // Predicated region
    $region54: #{tpu_custom_call.1} parent=1 // pred_check
      _
    $region55: #{tpu_custom_call.1} parent=1 // pred_check_branch
      %418 = sbr.rel (0) target = $region57
    $region56: #{tpu_custom_call.1} parent=1 // pred_region
      %419 = dma.done [#allocation4], 128
    $region57: #{tpu_custom_call.1} parent=1 // pred_fallthru
      _
    // Predicated region
    $region58: #{tpu_custom_call.1} parent=1 // pred_check
      _
    $region59: #{tpu_custom_call.1} parent=1 // pred_check_branch
      %421 = sbr.rel (0) target = $region61
    $region60: #{tpu_custom_call.1} parent=1 // pred_region
      %422 = dma.done [#allocation12], 128
    $region61: #{tpu_custom_call.1} parent=1 // pred_fallthru
      _
    %423 = vsyncpa [#allocation3], 1
    %424 = vsyncpa [#allocation6], 1
    %425 = vsyncpa [#allocation9], 1
    %426 = vsyncpa [#allocation4], 1
    %427 = vsyncpa [#allocation12], 1

</llo_original>
